<compile_context>
chip_gen: v6e
topology: v6e:2x2x1
jax: 0.10.0
libtpu: 0.0.40
codegen_flags: <defaults>
</compile_context>

<pallas_src>
import math

import jax
import jax.numpy as jnp
from jax.experimental import pallas as pl
from jax.experimental.pallas import tpu as pltpu


def _attention_fusion_kernel(meta_ref, wv_ref, wo_ref, b_ref, o_ref):
    """out = (meta @ Wv^T + bv) @ Wo^T + bo  (exact MHA forward for 1 key)."""
    meta = meta_ref[...]

    # V projection == exact attention output: softmax over a single key is 1,
    # so the Q/K projections, scores and softmax are mathematically dead and
    # are not computed.
    v = jnp.dot(meta, wv_ref[...], preferred_element_type=jnp.float32)
    v = v + b_ref[0:1, :].astype(jnp.float32)

    # Output projection.
    out = jnp.dot(v.astype(wo_ref.dtype), wo_ref[...],
                  preferred_element_type=jnp.float32)
    out = out + b_ref[1:2, :].astype(jnp.float32)

    o_ref[...] = out.astype(o_ref.dtype)


def prepare_attention_fusion_params(in_proj_weight, in_proj_bias,
                                    out_proj_weight, out_proj_bias,
                                    dtype=None):
    """One-time weight prep (hoist this out of the per-call hot path).

    Pre-transposes Wv / Wo so the kernel issues plain row-major x @ W matmuls
    and packs the two remaining biases into a single (2, D) block (one DMA /
    one sublane-padded VMEM buffer instead of two). Pass dtype=jnp.bfloat16 to
    halve weight HBM/VMEM traffic (f32 accumulation is kept in-kernel).
    """
    D = out_proj_weight.shape[0]
    if dtype is None:
        dtype = out_proj_weight.dtype
    wv_t = in_proj_weight[2 * D:3 * D].T.astype(dtype)       # (D, D)
    wo_t = out_proj_weight.T.astype(dtype)                    # (D, D)
    bias = jnp.stack([in_proj_bias[2 * D:3 * D],
                      out_proj_bias]).astype(dtype)           # (2, D)
    return wv_t, wo_t, bias


def _vmem_budget_bytes():
    try:
        info = pltpu.get_tpu_info()
        phys = int(getattr(info, "vmem_capacity_bytes", 64 * 1024 * 1024))
    except Exception:
        phys = 64 * 1024 * 1024   # v7x per-TC VMEM: most restrictive generation
    return (phys * 3) // 4        # leave headroom for compiler scratch


def _pick_tile_b(B, D, act_itemsize, out_itemsize, resident_bytes, budget):
    """Batch-row tile that fits the VMEM budget *including* resident weights."""
    # Double-buffered activation rows (metadata in + out) + f32 intermediates.
    per_row = D * (2 * act_itemsize + 2 * out_itemsize) + D * 8
    avail = budget - resident_bytes - (2 << 20)
    if avail <= per_row * 8:
        # TODO(synk): weights do not fit resident at this D; tile Wv/Wo over a
        # K-reduction grid axis ("arbitrary") with an f32 VMEM accumulator.
        avail = max(budget // 2, per_row * 8)
    max_rows = avail // per_row
    if B <= min(512, max_rows):
        return B                         # single block: full rows, no overhead
    tile = int(min(512, max_rows, B))    # ~512 rows: near HBM roofline on v6e
    if tile >= 128:
        tile = (tile // 128) * 128       # fill the MXU M dim (v5e: 128-multiples)
    else:
        tile = max(8, (tile // 8) * 8)
    return tile


def attention_fusion_apply(image_features, metadata_features, params,
                           num_heads=8):
    """AttentionFusion.forward with pre-prepared params. (B, D) -> (B, D)."""
    wv_t, wo_t, bias = params
    B, D = metadata_features.shape
    assert image_features.shape == (B, D)
    assert D % num_heads == 0
    # image_features (the query) is mathematically unused: with one key/value
    # position the softmax over keys is identically 1, so the attention output
    # is exactly the V projection of metadata_features.
    del image_features

    w_itemsize = jnp.dtype(wv_t.dtype).itemsize
    act_itemsize = jnp.dtype(metadata_features.dtype).itemsize
    out_dtype = metadata_features.dtype
    out_itemsize = jnp.dtype(out_dtype).itemsize

    # Resident (single-buffered) blocks: Wv^T, Wo^T and the (2,D) bias block
    # (padded to 8 sublanes in VMEM).
    resident = 2 * D * D * w_itemsize + 8 * D * w_itemsize
    budget = _vmem_budget_bytes()
    tile_b = _pick_tile_b(B, D, act_itemsize, out_itemsize, resident, budget)
    grid = (pl.cdiv(B, tile_b),)

    row_spec = pl.BlockSpec((tile_b, D), lambda i: (i, 0))

    def _run(single_buffer_weights):
        if single_buffer_weights:
            # Constant-index blocks never change across the grid, so
            # double-buffering them only doubles their VMEM residency.
            def const_spec(shape):
                return pl.BlockSpec(shape, lambda i: (0, 0),
                                    pipeline_mode=pl.Buffered(1))
        else:
            def const_spec(shape):
                return pl.BlockSpec(shape, lambda i: (0, 0))

        return pl.pallas_call(
            _attention_fusion_kernel,
            out_shape=jax.ShapeDtypeStruct((B, D), out_dtype),
            grid_spec=pltpu.PrefetchScalarGridSpec(
                num_scalar_prefetch=0,
                grid=grid,
                in_specs=[
                    row_spec,                  # metadata_features rows
                    const_spec((D, D)),        # Wv^T
                    const_spec((D, D)),        # Wo^T
                    const_spec((2, D)),        # packed [bv; bo]
                ],
                out_specs=row_spec,
            ),
            compiler_params=pltpu.CompilerParams(
                dimension_semantics=("parallel",),
                vmem_limit_bytes=int(budget),
            ),
        )(metadata_features, wv_t, wo_t, bias)

    try:
        return _run(True)
    except Exception:
        # Fallback only drops the single-buffering hint (perf, not semantics)
        # on JAX builds that reject pipeline_mode / Buffered(1).
        return _run(False)


def attention_fusion(image_features, metadata_features,
                     in_proj_weight, in_proj_bias,
                     out_proj_weight, out_proj_bias, num_heads=8):
    """Convenience wrapper: prep + apply (prefer hoisting prep out of hot path)."""
    params = prepare_attention_fusion_params(
        in_proj_weight, in_proj_bias, out_proj_weight, out_proj_bias)
    return attention_fusion_apply(image_features, metadata_features, params,
                                  num_heads=num_heads)


def _ref_attention_fusion(img, meta, w_in, b_in, w_out, b_out, num_heads):
    """Pure-JAX mirror of torch's F.multi_head_attention_forward for seq=1.

    Deliberately runs the FULL Q/K/softmax path to validate that the kernel's
    simplification is exact.
    """
    B, D = img.shape
    hd = D // num_heads
    hi = jax.lax.Precision.HIGHEST
    wq, wk, wv = w_in[:D], w_in[D:2 * D], w_in[2 * D:]
    bq, bk, bv = b_in[:D], b_in[D:2 * D], b_in[2 * D:]
    q = jnp.dot(img, wq.T, precision=hi) + bq
    k = jnp.dot(meta, wk.T, precision=hi) + bk
    v = jnp.dot(meta, wv.T, precision=hi) + bv
    qh = q.reshape(B, num_heads, hd)
    kh = k.reshape(B, num_heads, hd)
    vh = v.reshape(B, num_heads, hd)
    scores = (qh * kh).sum(-1) / jnp.sqrt(hd)          # (B, H), single key
    w = jax.nn.softmax(scores[..., None], axis=-1)     # over the 1-key axis
    attn = (w * vh).reshape(B, D)
    return jnp.dot(attn, w_out.T, precision=hi) + b_out


if __name__ == "__main__":
    key = jax.random.PRNGKey(0)
    B, dim, num_heads = 2, 32, 8                # embed_dim=32, 8 heads -> head_dim=4
    ks = jax.random.split(key, 6)

    image_features = jax.random.normal(ks[0], (B, dim), dtype=jnp.float32)
    metadata_features = jax.random.normal(ks[1], (B, dim), dtype=jnp.float32)

    # nn.MultiheadAttention parameters (deterministic; nonzero biases to
    # exercise the bias path — any values are a valid parameterization).
    in_proj_weight = jax.random.normal(ks[2], (3 * dim, dim), jnp.float32) / math.sqrt(dim)
    in_proj_bias = jax.random.normal(ks[3], (3 * dim,), jnp.float32) * 0.1
    out_proj_weight = jax.random.normal(ks[4], (dim, dim), jnp.float32) / math.sqrt(dim)
    out_proj_bias = jax.random.normal(ks[5], (dim,), jnp.float32) * 0.1

    # Weight prep once (outside the hot path), then the fused kernel call.
    params = prepare_attention_fusion_params(
        in_proj_weight, in_proj_bias, out_proj_weight, out_proj_bias)
    y = attention_fusion_apply(image_features, metadata_features, params,
                               num_heads=num_heads)
    y = jax.block_until_ready(y)

    ref = _ref_attention_fusion(image_features, metadata_features,
                                in_proj_weight, in_proj_bias,
                                out_proj_weight, out_proj_bias, num_heads)

    assert y.shape == (B, dim)
    # Tolerance covers TPU f32 matmuls running reduced-precision MXU passes at
    # DEFAULT precision; structural bugs would show O(0.1-1) errors.
    assert jnp.allclose(y, ref, rtol=2e-2, atol=2e-2), "mismatch vs reference"

    print("KERNEL_OK")
</pallas_src>

<mosaic_0001>
module attributes {stable_mosaic.version = 11 : i64} {
  func.func @_attention_fusion_kernel(%arg0: i32, %arg1: memref<2x32xf32, #tpu.memory_space<vmem>>, %arg2: memref<32x32xf32, #tpu.memory_space<vmem>>, %arg3: memref<32x32xf32, #tpu.memory_space<vmem>>, %arg4: memref<2x32xf32, #tpu.memory_space<vmem>>, %arg5: memref<2x32xf32, #tpu.memory_space<vmem>>) attributes {dimension_semantics = [#tpu.dimension_semantics<parallel>], iteration_bounds = array<i64: 1>, scalar_prefetch = 0 : i64, scratch_operands = 0 : i64, tpu.core_type = #tpu.core_type<tc>, window_params = [{transform_indices = @transform_0, window_bounds = array<i64: 2, 32>}, {pipeline_mode = #tpu.pipeline_mode<synchronous>, transform_indices = @transform_1, window_bounds = array<i64: 32, 32>}, {pipeline_mode = #tpu.pipeline_mode<synchronous>, transform_indices = @transform_2, window_bounds = array<i64: 32, 32>}, {pipeline_mode = #tpu.pipeline_mode<synchronous>, transform_indices = @transform_3, window_bounds = array<i64: 2, 32>}, {transform_indices = @transform_4, window_bounds = array<i64: 2, 32>}]} {
    %c0 = arith.constant 0 : index
    %c0_0 = arith.constant 0 : index
    %0 = vector.load %arg1[%c0, %c0_0] : memref<2x32xf32, #tpu.memory_space<vmem>>, vector<2x32xf32>
    %c0_1 = arith.constant 0 : index
    %c0_2 = arith.constant 0 : index
    %1 = vector.load %arg2[%c0_1, %c0_2] : memref<32x32xf32, #tpu.memory_space<vmem>>, vector<32x32xf32>
    %cst = arith.constant dense<0.000000e+00> : vector<2x32xf32>
    %2 = tpu.matmul %0, %1, %cst {dimension_numbers = #tpu.dot_dimension_numbers<[1], [0], [0], [1], [0, 0, 1, 1], [], []>} : vector<2x32xf32>, vector<32x32xf32>, vector<2x32xf32> -> vector<2x32xf32>
    %c0_3 = arith.constant 0 : index
    %c0_4 = arith.constant 0 : index
    %3 = vector.load %arg4[%c0_3, %c0_4] : memref<2x32xf32, #tpu.memory_space<vmem>>, vector<1x32xf32>
    %4 = vector.broadcast %3 : vector<1x32xf32> to vector<2x32xf32>
    %5 = arith.addf %2, %4 : vector<2x32xf32>
    %c0_5 = arith.constant 0 : index
    %c0_6 = arith.constant 0 : index
    %6 = vector.load %arg3[%c0_5, %c0_6] : memref<32x32xf32, #tpu.memory_space<vmem>>, vector<32x32xf32>
    %cst_7 = arith.constant dense<0.000000e+00> : vector<2x32xf32>
    %7 = tpu.matmul %5, %6, %cst_7 {dimension_numbers = #tpu.dot_dimension_numbers<[1], [0], [0], [1], [0, 0, 1, 1], [], []>} : vector<2x32xf32>, vector<32x32xf32>, vector<2x32xf32> -> vector<2x32xf32>
    %c1 = arith.constant 1 : index
    %c0_8 = arith.constant 0 : index
    %8 = vector.load %arg4[%c1, %c0_8] : memref<2x32xf32, #tpu.memory_space<vmem>>, vector<1x32xf32>
    %9 = vector.broadcast %8 : vector<1x32xf32> to vector<2x32xf32>
    %10 = arith.addf %7, %9 : vector<2x32xf32>
    %c0_9 = arith.constant 0 : index
    %c0_10 = arith.constant 0 : index
    %11 = vector.load %arg5[%c0_9, %c0_10] : memref<2x32xf32, #tpu.memory_space<vmem>>, vector<2x32xf32>
    tpu.vector_store %arg5[%c0_9, %c0_10], %10 {strides = array<i32>} : memref<2x32xf32, #tpu.memory_space<vmem>>, vector<2x32xf32>,
    return
  }
  func.func @transform_0(%arg0: i32) -> (i32, i32) {
    %c0_i32 = arith.constant 0 : i32
    %c0_i32_0 = arith.constant 0 : i32
    return %arg0, %c0_i32 : i32, i32
  }
  func.func @transform_1(%arg0: i32) -> (i32, i32) {
    %c0_i32 = arith.constant 0 : i32
    %c0_i32_0 = arith.constant 0 : i32
    %c0_i32_1 = arith.constant 0 : i32
    return %c0_i32, %c0_i32_0 : i32, i32
  }
  func.func @transform_2(%arg0: i32) -> (i32, i32) {
    %c0_i32 = arith.constant 0 : i32
    %c0_i32_0 = arith.constant 0 : i32
    %c0_i32_1 = arith.constant 0 : i32
    return %c0_i32, %c0_i32_0 : i32, i32
  }
  func.func @transform_3(%arg0: i32) -> (i32, i32) {
    %c0_i32 = arith.constant 0 : i32
    %c0_i32_0 = arith.constant 0 : i32
    %c0_i32_1 = arith.constant 0 : i32
    return %c0_i32, %c0_i32_0 : i32, i32
  }
  func.func @transform_4(%arg0: i32) -> (i32, i32) {
    %c0_i32 = arith.constant 0 : i32
    %c0_i32_0 = arith.constant 0 : i32
    return %arg0, %c0_i32 : i32, i32
  }
}

module attributes {stable_mosaic.version = 11 : i64} {
  func.func @_attention_fusion_kernel(%arg0: i32, %arg1: memref<2x32xf32, #tpu.memory_space<vmem>>, %arg2: memref<32x32xf32, #tpu.memory_space<vmem>>, %arg3: memref<32x32xf32, #tpu.memory_space<vmem>>, %arg4: memref<2x32xf32, #tpu.memory_space<vmem>>, %arg5: memref<2x32xf32, #tpu.memory_space<vmem>>) attributes {dimension_semantics = [#tpu.dimension_semantics<parallel>], iteration_bounds = array<i64: 1>, scalar_prefetch = 0 : i64, scratch_operands = 0 : i64, tpu.core_type = #tpu.core_type<tc>, window_params = [{transform_indices = @transform_0, window_bounds = array<i64: 2, 32>}, {pipeline_mode = #tpu.pipeline_mode<synchronous>, transform_indices = @transform_1, window_bounds = array<i64: 32, 32>}, {pipeline_mode = #tpu.pipeline_mode<synchronous>, transform_indices = @transform_2, window_bounds = array<i64: 32, 32>}, {pipeline_mode = #tpu.pipeline_mode<synchronous>, transform_indices = @transform_3, window_bounds = array<i64: 2, 32>}, {transform_indices = @transform_4, window_bounds = array<i64: 2, 32>}]} {
    %c0 = arith.constant 0 : index
    %c0_0 = arith.constant 0 : index
    %0 = vector.load %arg1[%c0, %c0_0] : memref<2x32xf32, #tpu.memory_space<vmem>>, vector<2x32xf32>
    %c0_1 = arith.constant 0 : index
    %c0_2 = arith.constant 0 : index
    %1 = vector.load %arg2[%c0_1, %c0_2] : memref<32x32xf32, #tpu.memory_space<vmem>>, vector<32x32xf32>
    %cst = arith.constant dense<0.000000e+00> : vector<2x32xf32>
    %2 = tpu.matmul %0, %1, %cst {dimension_numbers = #tpu.dot_dimension_numbers<[1], [0], [0], [1], [0, 0, 1, 1], [], []>} : vector<2x32xf32>, vector<32x32xf32>, vector<2x32xf32> -> vector<2x32xf32>
    %c0_3 = arith.constant 0 : index
    %c0_4 = arith.constant 0 : index
    %3 = vector.load %arg4[%c0_3, %c0_4] : memref<2x32xf32, #tpu.memory_space<vmem>>, vector<1x32xf32>
    %4 = vector.broadcast %3 : vector<1x32xf32> to vector<2x32xf32>
    %5 = arith.addf %2, %4 : vector<2x32xf32>
    %c0_5 = arith.constant 0 : index
    %c0_6 = arith.constant 0 : index
    %6 = vector.load %arg3[%c0_5, %c0_6] : memref<32x32xf32, #tpu.memory_space<vmem>>, vector<32x32xf32>
    %cst_7 = arith.constant dense<0.000000e+00> : vector<2x32xf32>
    %7 = tpu.matmul %5, %6, %cst_7 {dimension_numbers = #tpu.dot_dimension_numbers<[1], [0], [0], [1], [0, 0, 1, 1], [], []>} : vector<2x32xf32>, vector<32x32xf32>, vector<2x32xf32> -> vector<2x32xf32>
    %c1 = arith.constant 1 : index
    %c0_8 = arith.constant 0 : index
    %8 = vector.load %arg4[%c1, %c0_8] : memref<2x32xf32, #tpu.memory_space<vmem>>, vector<1x32xf32>
    %9 = vector.broadcast %8 : vector<1x32xf32> to vector<2x32xf32>
    %10 = arith.addf %7, %9 : vector<2x32xf32>
    %c0_9 = arith.constant 0 : index
    %c0_10 = arith.constant 0 : index
    %11 = vector.load %arg5[%c0_9, %c0_10] : memref<2x32xf32, #tpu.memory_space<vmem>>, vector<2x32xf32>
    tpu.vector_store %arg5[%c0_9, %c0_10], %10 {strides = array<i32>} : memref<2x32xf32, #tpu.memory_space<vmem>>, vector<2x32xf32>,
    return
  }
  func.func @transform_0(%arg0: i32) -> (i32, i32) {
    %c0_i32 = arith.constant 0 : i32
    %c0_i32_0 = arith.constant 0 : i32
    return %arg0, %c0_i32 : i32, i32
  }
  func.func @transform_1(%arg0: i32) -> (i32, i32) {
    %c0_i32 = arith.constant 0 : i32
    %c0_i32_0 = arith.constant 0 : i32
    %c0_i32_1 = arith.constant 0 : i32
    return %c0_i32, %c0_i32_0 : i32, i32
  }
  func.func @transform_2(%arg0: i32) -> (i32, i32) {
    %c0_i32 = arith.constant 0 : i32
    %c0_i32_0 = arith.constant 0 : i32
    %c0_i32_1 = arith.constant 0 : i32
    return %c0_i32, %c0_i32_0 : i32, i32
  }
  func.func @transform_3(%arg0: i32) -> (i32, i32) {
    %c0_i32 = arith.constant 0 : i32
    %c0_i32_0 = arith.constant 0 : i32
    %c0_i32_1 = arith.constant 0 : i32
    return %c0_i32, %c0_i32_0 : i32, i32
  }
  func.func @transform_4(%arg0: i32) -> (i32, i32) {
    %c0_i32 = arith.constant 0 : i32
    %c0_i32_0 = arith.constant 0 : i32
    return %arg0, %c0_i32 : i32, i32
  }
}

</mosaic_0001>

<llo_original>
// kernel: tpu_custom_call.1
$region0: #{tpu_custom_call.1}
  #allocation0 [shape = 'u32[]', space=smem, size = 0x4, offset = 0x4, fixed_abs, tag = 'smem constant byte address 0x4 - core index']
  #allocation1 [shape = 'u32[144,128]{1,0:T(1,128)}', space=vmem, size = 0x12000, scoped, tag = 'internal scratch']
  %s0 = inlined_call_operand.hbm [shape: f32[2,32], index: 0, kind: input, shape index: {}]
  %s1 = inlined_call_operand.hbm [shape: f32[32,32], index: 1, kind: input, shape index: {}]
  %s2 = inlined_call_operand.hbm [shape: f32[32,32], index: 2, kind: input, shape index: {}]
  %s3 = inlined_call_operand.vmem [shape: f32[2,32], index: 3, kind: input, shape index: {}]
  %s4 = inlined_call_operand.hbm [shape: f32[2,32], index: 4, kind: output, shape index: {}]
  %s5 = sld [smem:[#allocation0]]
  $region38: #{tpu_custom_call.1} parent=0
    _
  %s7 = ssub.s32 1, %s5
  %s8 = scalar_select 0, %s7, %s5
  $region1: #{tpu_custom_call.1} parent=0
    #allocation2 [shape = 'u8[1024]{0}', space=vmem, size = 0x400, scoped, tag = 'input window, operand 0, single buffered']
    #allocation3 [shape = 's32[1]{0}', space=sflag, size = 0x4, scoped, tag = 'scoped memory for tpu_custom_call.1']
    #allocation4 [shape = 's32[1]{0}', space=sflag, size = 0x4, scoped, tag = 'scoped memory for tpu_custom_call.1']
    #allocation5 [shape = 'u8[16384]{0}', space=vmem, size = 0x4000, scoped, tag = 'input window, operand 1, single buffered']
    #allocation6 [shape = 's32[1]{0}', space=sflag, size = 0x4, scoped, tag = 'scoped memory for tpu_custom_call.1']
    #allocation7 [shape = 'u8[16384]{0}', space=vmem, size = 0x4000, scoped, tag = 'input window, operand 2, single buffered']
    #allocation8 [shape = 'u8[1024]{0}', space=vmem, size = 0x400, scoped, tag = 'output window, operand 0, single buffered']
    %9 = vsyncpa [#allocation3], 0
    %10 = vsyncpa [#allocation6], 0
    %11 = vsyncpa [#allocation4], 0
    // Predicated region
    $region2: #{tpu_custom_call.1} parent=1 // pred_check
      _
    $region3: #{tpu_custom_call.1} parent=1 // pred_check_branch
      %13 = sbr.rel (0) target = $region5
    $region4: #{tpu_custom_call.1} parent=1 // pred_region
      %s15 = ssub.s32 32, 32
      %16 = vsyncadd [#allocation3], %s15
      %s18 = sshll.u32 [#allocation2], 4
      %s19 = int_to_ptr.vmem [resolvable:$true] %s18
      %21 = dma.hbm_to_vmem [thread:$0]  %s0, 32, %s19, [#allocation3]
    $region5: #{tpu_custom_call.1} parent=1 // pred_fallthru
      _
    // Predicated region
    $region6: #{tpu_custom_call.1} parent=1 // pred_check
      _
    $region7: #{tpu_custom_call.1} parent=1 // pred_check_branch
      %23 = sbr.rel (0) target = $region9
    $region8: #{tpu_custom_call.1} parent=1 // pred_region
      %s25 = ssub.s32 512, 512
      %26 = vsyncadd [#allocation6], %s25
      %s27 = sshll.u32 [#allocation5], 4
      %s28 = int_to_ptr.vmem [resolvable:$true] %s27
      %33 = dma.hbm_to_vmem [thread:$0]  %s1, 512, %s28, [#allocation6], 128, 128, 8
    $region9: #{tpu_custom_call.1} parent=1 // pred_fallthru
      _
    // Predicated region
    $region10: #{tpu_custom_call.1} parent=1 // pred_check
      _
    $region11: #{tpu_custom_call.1} parent=1 // pred_check_branch
      %35 = sbr.rel (0) target = $region13
    $region12: #{tpu_custom_call.1} parent=1 // pred_region
      %s37 = ssub.s32 512, 512
      %38 = vsyncadd [#allocation6], %s37
      %s39 = sshll.u32 [#allocation7], 4
      %s40 = int_to_ptr.vmem [resolvable:$true] %s39
      %45 = dma.hbm_to_vmem [thread:$0]  %s2, 512, %s40, [#allocation6], 128, 128, 8
    $region13: #{tpu_custom_call.1} parent=1 // pred_fallthru
      _
    // Predicated region
    $region14: #{tpu_custom_call.1} parent=1 // pred_check
      _
    $region15: #{tpu_custom_call.1} parent=1 // pred_check_branch
      %47 = sbr.rel (0) target = $region17
    $region16: #{tpu_custom_call.1} parent=1 // pred_region
      _
    $region17: #{tpu_custom_call.1} parent=1 // pred_fallthru
      _
    // Predicated region
    $region18: #{tpu_custom_call.1} parent=1 // pred_check
      _
    $region19: #{tpu_custom_call.1} parent=1 // pred_check_branch
      %49 = sbr.rel (0) target = $region21
    $region20: #{tpu_custom_call.1} parent=1 // pred_region
      %50 = dma.done [#allocation3], 32
    $region21: #{tpu_custom_call.1} parent=1 // pred_fallthru
      _
    // Predicated region
    $region22: #{tpu_custom_call.1} parent=1 // pred_check
      _
    $region23: #{tpu_custom_call.1} parent=1 // pred_check_branch
      %52 = sbr.rel (0) target = $region25
    $region24: #{tpu_custom_call.1} parent=1 // pred_region
      %53 = dma.done [#allocation6], 512
    $region25: #{tpu_custom_call.1} parent=1 // pred_fallthru
      _
    // Predicated region
    $region26: #{tpu_custom_call.1} parent=1 // pred_check
      _
    $region27: #{tpu_custom_call.1} parent=1 // pred_check_branch
      %55 = sbr.rel (0) target = $region29
    $region28: #{tpu_custom_call.1} parent=1 // pred_region
      %56 = dma.done [#allocation6], 512
    $region29: #{tpu_custom_call.1} parent=1 // pred_fallthru
      _
    %v57 = vld [vmem:[#allocation2] sm:$0x3]
    %v58 = vld [vmem:[#allocation5] sm:$0xff]
    %v59 = vld [vmem:[#allocation5 + $0x8] sm:$0xff]
    %v60 = vld [vmem:[#allocation5 + $0x10] sm:$0xff]
    %v61 = vld [vmem:[#allocation5 + $0x18] sm:$0xff]
    %v62 = vld [vmem:[%s3] sm:$0x1]
    %v63 = vlaneseq
    %v64 = vshrl.u32 %v63, 7
    %v65 = vsub.s32 0, %v64
    %v66 = vrot.slane %v62, %v65
    %vm67 = vcmask 261120
    %v69 = vsel %vm67, %v57, 0
    %71 = vmatprep.subr.mxu0 0.0
    %72 = vmatpush1.msra.mxu0 0.0
    %73 = vmatprep.subr.mxu0 0.0
    %74 = vmatpush1.msra.mxu0 0.0
    %75 = vmatprep.subr.mxu0 0.0
    %76 = vmatpush1.msra.mxu0 0.0
    %77 = vmatprep.subr.mxu0 0.0
    %78 = vmatpush1.msra.mxu0 0.0
    %79 = vmatprep.subr.mxu0 0.0
    %80 = vmatpush1.msra.mxu0 0.0
    %81 = vmatprep.subr.mxu0 0.0
    %82 = vmatpush1.msra.mxu0 0.0
    %83 = vmatprep.subr.mxu0 0.0
    %84 = vmatpush1.msra.mxu0 0.0
    %85 = vmatprep.subr.mxu0 0.0
    %86 = vmatpush1.msra.mxu0 0.0
    %87 = vmatprep.subr.mxu0 0.0
    %88 = vmatpush1.msra.mxu0 0.0
    %89 = vmatprep.subr.mxu0 0.0
    %90 = vmatpush1.msra.mxu0 0.0
    %91 = vmatprep.subr.mxu0 0.0
    %92 = vmatpush1.msra.mxu0 0.0
    %93 = vmatprep.subr.mxu0 0.0
    %94 = vmatpush1.msra.mxu0 0.0
    %95 = vmatprep.subr.mxu0 0.0
    %96 = vmatpush1.msra.mxu0 %v61
    %97 = vmatprep.subr.mxu0 0.0
    %98 = vmatpush1.msra.mxu0 %v60
    %99 = vmatprep.subr.mxu0 0.0
    %100 = vmatpush1.msra.mxu0 %v59
    %101 = vmatprep.subr.mxu0 0.0
    %102 = vmatpush1.msra.mxu0 %v58
    %103 = vmatprep.subr.mxu0 0.0
    %104 = vmatpush2.msra.mxu0 0.0
    %105 = vmatprep.subr.mxu0 0.0
    %106 = vmatpush2.msra.mxu0 0.0
    %107 = vmatprep.subr.mxu0 0.0
    %108 = vmatpush2.msra.mxu0 0.0
    %109 = vmatprep.subr.mxu0 0.0
    %110 = vmatpush2.msra.mxu0 0.0
    %111 = vmatprep.subr.mxu0 0.0
    %112 = vmatpush2.msra.mxu0 0.0
    %113 = vmatprep.subr.mxu0 0.0
    %114 = vmatpush2.msra.mxu0 0.0
    %115 = vmatprep.subr.mxu0 0.0
    %116 = vmatpush2.msra.mxu0 0.0
    %117 = vmatprep.subr.mxu0 0.0
    %118 = vmatpush2.msra.mxu0 0.0
    %119 = vmatprep.subr.mxu0 0.0
    %120 = vmatpush2.msra.mxu0 0.0
    %121 = vmatprep.subr.mxu0 0.0
    %122 = vmatpush2.msra.mxu0 0.0
    %123 = vmatprep.subr.mxu0 0.0
    %124 = vmatpush2.msra.mxu0 0.0
    %125 = vmatprep.subr.mxu0 0.0
    %126 = vmatpush2.msra.mxu0 0.0
    %127 = vmatprep.subr.mxu0 0.0
    %128 = vmatpush2.msra.mxu0 0.0
    %129 = vmatprep.subr.mxu0 0.0
    %130 = vmatpush2.msra.mxu0 0.0
    %131 = vmatprep.subr.mxu0 0.0
    %132 = vmatpush2.msra.mxu0 0.0
    %133 = vmatprep.subr.mxu0 0.0
    %134 = vmatpush2.msra.mxu0 0.0
    %135 = vmatprep.mubr.f32.mxu0 0.0
    %136 = vmatmul.mubr.f32.gmra.mxu0 %v69
    %v137 = vpop.f32.mrf.mxu0
    %v138 = vadd.f32 %v66, %v137
    %v139 = vpop.f32.mrf.mxu0
    %140 = vdwg.mxu0
    %v141 = vld [vmem:[#allocation7] sm:$0xff]
    %v142 = vld [vmem:[#allocation7 + $0x8] sm:$0xff]
    %v143 = vld [vmem:[#allocation7 + $0x10] sm:$0xff]
    %v144 = vld [vmem:[#allocation7 + $0x18] sm:$0xff]
    %v145 = vld [vmem:[%s3 + $0x1] sm:$0x1]
    %v146 = vlaneseq
    %v147 = vshrl.u32 %v146, 7
    %v148 = vsub.s32 0, %v147
    %v149 = vrot.slane %v145, %v148
    %v151 = vsel %vm67, %v138, 0
    %153 = vmatprep.subr.mxu0 0.0
    %154 = vmatpush1.msra.mxu0 0.0
    %155 = vmatprep.subr.mxu0 0.0
    %156 = vmatpush1.msra.mxu0 0.0
    %157 = vmatprep.subr.mxu0 0.0
    %158 = vmatpush1.msra.mxu0 0.0
    %159 = vmatprep.subr.mxu0 0.0
    %160 = vmatpush1.msra.mxu0 0.0
    %161 = vmatprep.subr.mxu0 0.0
    %162 = vmatpush1.msra.mxu0 0.0
    %163 = vmatprep.subr.mxu0 0.0
    %164 = vmatpush1.msra.mxu0 0.0
    %165 = vmatprep.subr.mxu0 0.0
    %166 = vmatpush1.msra.mxu0 0.0
    %167 = vmatprep.subr.mxu0 0.0
    %168 = vmatpush1.msra.mxu0 0.0
    %169 = vmatprep.subr.mxu0 0.0
    %170 = vmatpush1.msra.mxu0 0.0
    %171 = vmatprep.subr.mxu0 0.0
    %172 = vmatpush1.msra.mxu0 0.0
    %173 = vmatprep.subr.mxu0 0.0
    %174 = vmatpush1.msra.mxu0 0.0
    %175 = vmatprep.subr.mxu0 0.0
    %176 = vmatpush1.msra.mxu0 0.0
    %177 = vmatprep.subr.mxu0 0.0
    %178 = vmatpush1.msra.mxu0 %v144
    %179 = vmatprep.subr.mxu0 0.0
    %180 = vmatpush1.msra.mxu0 %v143
    %181 = vmatprep.subr.mxu0 0.0
    %182 = vmatpush1.msra.mxu0 %v142
    %183 = vmatprep.subr.mxu0 0.0
    %184 = vmatpush1.msra.mxu0 %v141
    %185 = vmatprep.subr.mxu0 0.0
    %186 = vmatpush2.msra.mxu0 0.0
    %187 = vmatprep.subr.mxu0 0.0
    %188 = vmatpush2.msra.mxu0 0.0
    %189 = vmatprep.subr.mxu0 0.0
    %190 = vmatpush2.msra.mxu0 0.0
    %191 = vmatprep.subr.mxu0 0.0
    %192 = vmatpush2.msra.mxu0 0.0
    %193 = vmatprep.subr.mxu0 0.0
    %194 = vmatpush2.msra.mxu0 0.0
    %195 = vmatprep.subr.mxu0 0.0
    %196 = vmatpush2.msra.mxu0 0.0
    %197 = vmatprep.subr.mxu0 0.0
    %198 = vmatpush2.msra.mxu0 0.0
    %199 = vmatprep.subr.mxu0 0.0
    %200 = vmatpush2.msra.mxu0 0.0
    %201 = vmatprep.subr.mxu0 0.0
    %202 = vmatpush2.msra.mxu0 0.0
    %203 = vmatprep.subr.mxu0 0.0
    %204 = vmatpush2.msra.mxu0 0.0
    %205 = vmatprep.subr.mxu0 0.0
    %206 = vmatpush2.msra.mxu0 0.0
    %207 = vmatprep.subr.mxu0 0.0
    %208 = vmatpush2.msra.mxu0 0.0
    %209 = vmatprep.subr.mxu0 0.0
    %210 = vmatpush2.msra.mxu0 0.0
    %211 = vmatprep.subr.mxu0 0.0
    %212 = vmatpush2.msra.mxu0 0.0
    %213 = vmatprep.subr.mxu0 0.0
    %214 = vmatpush2.msra.mxu0 0.0
    %215 = vmatprep.subr.mxu0 0.0
    %216 = vmatpush2.msra.mxu0 0.0
    %217 = vmatprep.mubr.f32.mxu0 0.0
    %218 = vmatmul.mubr.f32.gmra.mxu0 %v151
    %v219 = vpop.f32.mrf.mxu0
    %v220 = vadd.f32 %v149, %v219
    %v221 = vpop.f32.mrf.mxu0
    %222 = vdwg.mxu0
    %vm223 = vcmask 254976
    %224 = vst.msk [vmem:[#allocation8] sm:$0x3] %vm223, %v220
    // Predicated region
    $region30: #{tpu_custom_call.1} parent=1 // pred_check
      _
    $region31: #{tpu_custom_call.1} parent=1 // pred_check_branch
      %226 = sbr.rel (0) target = $region33
    $region32: #{tpu_custom_call.1} parent=1 // pred_region
      %s228 = ssub.s32 32, 32
      %229 = vsyncadd [#allocation4], %s228
      %s231 = sshll.u32 [#allocation8], 4
      %s232 = int_to_ptr.vmem [resolvable:$true] %s231
      %234 = dma.vmem_to_hbm [thread:$0]  %s232, 32, %s4, [#allocation4]
    $region33: #{tpu_custom_call.1} parent=1 // pred_fallthru
      _
    // Predicated region
    $region34: #{tpu_custom_call.1} parent=1 // pred_check
      _
    $region35: #{tpu_custom_call.1} parent=1 // pred_check_branch
      %236 = sbr.rel (0) target = $region37
    $region36: #{tpu_custom_call.1} parent=1 // pred_region
      %237 = dma.done [#allocation4], 32
    $region37: #{tpu_custom_call.1} parent=1 // pred_fallthru
      _
    %238 = vsyncpa [#allocation3], 1
    %239 = vsyncpa [#allocation6], 1
    %240 = vsyncpa [#allocation4], 1

// kernel: tpu_custom_call.1
$region0: #{tpu_custom_call.1}
  #allocation0 [shape = 'u32[]', space=smem, size = 0x4, offset = 0x4, fixed_abs, tag = 'smem constant byte address 0x4 - core index']
  #allocation1 [shape = 'u32[144,128]{1,0:T(1,128)}', space=vmem, size = 0x12000, scoped, tag = 'internal scratch']
  %s0 = inlined_call_operand.hbm [shape: f32[2,32], index: 0, kind: input, shape index: {}]
  %s1 = inlined_call_operand.hbm [shape: f32[32,32], index: 1, kind: input, shape index: {}]
  %s2 = inlined_call_operand.hbm [shape: f32[32,32], index: 2, kind: input, shape index: {}]
  %s3 = inlined_call_operand.vmem [shape: f32[2,32], index: 3, kind: input, shape index: {}]
  %s4 = inlined_call_operand.hbm [shape: f32[2,32], index: 4, kind: output, shape index: {}]
  %s5 = sld [smem:[#allocation0]]
  $region38: #{tpu_custom_call.1} parent=0
    _
  %s7 = ssub.s32 1, %s5
  %s8 = scalar_select 0, %s7, %s5
  $region1: #{tpu_custom_call.1} parent=0
    #allocation2 [shape = 'u8[1024]{0}', space=vmem, size = 0x400, scoped, tag = 'input window, operand 0, single buffered']
    #allocation3 [shape = 's32[1]{0}', space=sflag, size = 0x4, scoped, tag = 'scoped memory for tpu_custom_call.1']
    #allocation4 [shape = 's32[1]{0}', space=sflag, size = 0x4, scoped, tag = 'scoped memory for tpu_custom_call.1']
    #allocation5 [shape = 'u8[16384]{0}', space=vmem, size = 0x4000, scoped, tag = 'input window, operand 1, single buffered']
    #allocation6 [shape = 's32[1]{0}', space=sflag, size = 0x4, scoped, tag = 'scoped memory for tpu_custom_call.1']
    #allocation7 [shape = 'u8[16384]{0}', space=vmem, size = 0x4000, scoped, tag = 'input window, operand 2, single buffered']
    #allocation8 [shape = 'u8[1024]{0}', space=vmem, size = 0x400, scoped, tag = 'output window, operand 0, single buffered']
    %9 = vsyncpa [#allocation3], 0
    %10 = vsyncpa [#allocation6], 0
    %11 = vsyncpa [#allocation4], 0
    // Predicated region
    $region2: #{tpu_custom_call.1} parent=1 // pred_check
      _
    $region3: #{tpu_custom_call.1} parent=1 // pred_check_branch
      %13 = sbr.rel (0) target = $region5
    $region4: #{tpu_custom_call.1} parent=1 // pred_region
      %s15 = ssub.s32 32, 32
      %16 = vsyncadd [#allocation3], %s15
      %s18 = sshll.u32 [#allocation2], 4
      %s19 = int_to_ptr.vmem [resolvable:$true] %s18
      %21 = dma.hbm_to_vmem [thread:$0]  %s0, 32, %s19, [#allocation3]
    $region5: #{tpu_custom_call.1} parent=1 // pred_fallthru
      _
    // Predicated region
    $region6: #{tpu_custom_call.1} parent=1 // pred_check
      _
    $region7: #{tpu_custom_call.1} parent=1 // pred_check_branch
      %23 = sbr.rel (0) target = $region9
    $region8: #{tpu_custom_call.1} parent=1 // pred_region
      %s25 = ssub.s32 512, 512
      %26 = vsyncadd [#allocation6], %s25
      %s27 = sshll.u32 [#allocation5], 4
      %s28 = int_to_ptr.vmem [resolvable:$true] %s27
      %33 = dma.hbm_to_vmem [thread:$0]  %s1, 512, %s28, [#allocation6], 128, 128, 8
    $region9: #{tpu_custom_call.1} parent=1 // pred_fallthru
      _
    // Predicated region
    $region10: #{tpu_custom_call.1} parent=1 // pred_check
      _
    $region11: #{tpu_custom_call.1} parent=1 // pred_check_branch
      %35 = sbr.rel (0) target = $region13
    $region12: #{tpu_custom_call.1} parent=1 // pred_region
      %s37 = ssub.s32 512, 512
      %38 = vsyncadd [#allocation6], %s37
      %s39 = sshll.u32 [#allocation7], 4
      %s40 = int_to_ptr.vmem [resolvable:$true] %s39
      %45 = dma.hbm_to_vmem [thread:$0]  %s2, 512, %s40, [#allocation6], 128, 128, 8
    $region13: #{tpu_custom_call.1} parent=1 // pred_fallthru
      _
    // Predicated region
    $region14: #{tpu_custom_call.1} parent=1 // pred_check
      _
    $region15: #{tpu_custom_call.1} parent=1 // pred_check_branch
      %47 = sbr.rel (0) target = $region17
    $region16: #{tpu_custom_call.1} parent=1 // pred_region
      _
    $region17: #{tpu_custom_call.1} parent=1 // pred_fallthru
      _
    // Predicated region
    $region18: #{tpu_custom_call.1} parent=1 // pred_check
      _
    $region19: #{tpu_custom_call.1} parent=1 // pred_check_branch
      %49 = sbr.rel (0) target = $region21
    $region20: #{tpu_custom_call.1} parent=1 // pred_region
      %50 = dma.done [#allocation3], 32
    $region21: #{tpu_custom_call.1} parent=1 // pred_fallthru
      _
    // Predicated region
    $region22: #{tpu_custom_call.1} parent=1 // pred_check
      _
    $region23: #{tpu_custom_call.1} parent=1 // pred_check_branch
      %52 = sbr.rel (0) target = $region25
    $region24: #{tpu_custom_call.1} parent=1 // pred_region
      %53 = dma.done [#allocation6], 512
    $region25: #{tpu_custom_call.1} parent=1 // pred_fallthru
      _
    // Predicated region
    $region26: #{tpu_custom_call.1} parent=1 // pred_check
      _
    $region27: #{tpu_custom_call.1} parent=1 // pred_check_branch
      %55 = sbr.rel (0) target = $region29
    $region28: #{tpu_custom_call.1} parent=1 // pred_region
      %56 = dma.done [#allocation6], 512
    $region29: #{tpu_custom_call.1} parent=1 // pred_fallthru
      _
    %v57 = vld [vmem:[#allocation2] sm:$0x3]
    %v58 = vld [vmem:[#allocation5] sm:$0xff]
    %v59 = vld [vmem:[#allocation5 + $0x8] sm:$0xff]
    %v60 = vld [vmem:[#allocation5 + $0x10] sm:$0xff]
    %v61 = vld [vmem:[#allocation5 + $0x18] sm:$0xff]
    %v62 = vld [vmem:[%s3] sm:$0x1]
    %v63 = vlaneseq
    %v64 = vshrl.u32 %v63, 7
    %v65 = vsub.s32 0, %v64
    %v66 = vrot.slane %v62, %v65
    %vm67 = vcmask 261120
    %v69 = vsel %vm67, %v57, 0
    %71 = vmatprep.subr.mxu0 0.0
    %72 = vmatpush1.msra.mxu0 0.0
    %73 = vmatprep.subr.mxu0 0.0
    %74 = vmatpush1.msra.mxu0 0.0
    %75 = vmatprep.subr.mxu0 0.0
    %76 = vmatpush1.msra.mxu0 0.0
    %77 = vmatprep.subr.mxu0 0.0
    %78 = vmatpush1.msra.mxu0 0.0
    %79 = vmatprep.subr.mxu0 0.0
    %80 = vmatpush1.msra.mxu0 0.0
    %81 = vmatprep.subr.mxu0 0.0
    %82 = vmatpush1.msra.mxu0 0.0
    %83 = vmatprep.subr.mxu0 0.0
    %84 = vmatpush1.msra.mxu0 0.0
    %85 = vmatprep.subr.mxu0 0.0
    %86 = vmatpush1.msra.mxu0 0.0
    %87 = vmatprep.subr.mxu0 0.0
    %88 = vmatpush1.msra.mxu0 0.0
    %89 = vmatprep.subr.mxu0 0.0
    %90 = vmatpush1.msra.mxu0 0.0
    %91 = vmatprep.subr.mxu0 0.0
    %92 = vmatpush1.msra.mxu0 0.0
    %93 = vmatprep.subr.mxu0 0.0
    %94 = vmatpush1.msra.mxu0 0.0
    %95 = vmatprep.subr.mxu0 0.0
    %96 = vmatpush1.msra.mxu0 %v61
    %97 = vmatprep.subr.mxu0 0.0
    %98 = vmatpush1.msra.mxu0 %v60
    %99 = vmatprep.subr.mxu0 0.0
    %100 = vmatpush1.msra.mxu0 %v59
    %101 = vmatprep.subr.mxu0 0.0
    %102 = vmatpush1.msra.mxu0 %v58
    %103 = vmatprep.subr.mxu0 0.0
    %104 = vmatpush2.msra.mxu0 0.0
    %105 = vmatprep.subr.mxu0 0.0
    %106 = vmatpush2.msra.mxu0 0.0
    %107 = vmatprep.subr.mxu0 0.0
    %108 = vmatpush2.msra.mxu0 0.0
    %109 = vmatprep.subr.mxu0 0.0
    %110 = vmatpush2.msra.mxu0 0.0
    %111 = vmatprep.subr.mxu0 0.0
    %112 = vmatpush2.msra.mxu0 0.0
    %113 = vmatprep.subr.mxu0 0.0
    %114 = vmatpush2.msra.mxu0 0.0
    %115 = vmatprep.subr.mxu0 0.0
    %116 = vmatpush2.msra.mxu0 0.0
    %117 = vmatprep.subr.mxu0 0.0
    %118 = vmatpush2.msra.mxu0 0.0
    %119 = vmatprep.subr.mxu0 0.0
    %120 = vmatpush2.msra.mxu0 0.0
    %121 = vmatprep.subr.mxu0 0.0
    %122 = vmatpush2.msra.mxu0 0.0
    %123 = vmatprep.subr.mxu0 0.0
    %124 = vmatpush2.msra.mxu0 0.0
    %125 = vmatprep.subr.mxu0 0.0
    %126 = vmatpush2.msra.mxu0 0.0
    %127 = vmatprep.subr.mxu0 0.0
    %128 = vmatpush2.msra.mxu0 0.0
    %129 = vmatprep.subr.mxu0 0.0
    %130 = vmatpush2.msra.mxu0 0.0
    %131 = vmatprep.subr.mxu0 0.0
    %132 = vmatpush2.msra.mxu0 0.0
    %133 = vmatprep.subr.mxu0 0.0
    %134 = vmatpush2.msra.mxu0 0.0
    %135 = vmatprep.mubr.f32.mxu0 0.0
    %136 = vmatmul.mubr.f32.gmra.mxu0 %v69
    %v137 = vpop.f32.mrf.mxu0
    %v138 = vadd.f32 %v66, %v137
    %v139 = vpop.f32.mrf.mxu0
    %140 = vdwg.mxu0
    %v141 = vld [vmem:[#allocation7] sm:$0xff]
    %v142 = vld [vmem:[#allocation7 + $0x8] sm:$0xff]
    %v143 = vld [vmem:[#allocation7 + $0x10] sm:$0xff]
    %v144 = vld [vmem:[#allocation7 + $0x18] sm:$0xff]
    %v145 = vld [vmem:[%s3 + $0x1] sm:$0x1]
    %v146 = vlaneseq
    %v147 = vshrl.u32 %v146, 7
    %v148 = vsub.s32 0, %v147
    %v149 = vrot.slane %v145, %v148
    %v151 = vsel %vm67, %v138, 0
    %153 = vmatprep.subr.mxu0 0.0
    %154 = vmatpush1.msra.mxu0 0.0
    %155 = vmatprep.subr.mxu0 0.0
    %156 = vmatpush1.msra.mxu0 0.0
    %157 = vmatprep.subr.mxu0 0.0
    %158 = vmatpush1.msra.mxu0 0.0
    %159 = vmatprep.subr.mxu0 0.0
    %160 = vmatpush1.msra.mxu0 0.0
    %161 = vmatprep.subr.mxu0 0.0
    %162 = vmatpush1.msra.mxu0 0.0
    %163 = vmatprep.subr.mxu0 0.0
    %164 = vmatpush1.msra.mxu0 0.0
    %165 = vmatprep.subr.mxu0 0.0
    %166 = vmatpush1.msra.mxu0 0.0
    %167 = vmatprep.subr.mxu0 0.0
    %168 = vmatpush1.msra.mxu0 0.0
    %169 = vmatprep.subr.mxu0 0.0
    %170 = vmatpush1.msra.mxu0 0.0
    %171 = vmatprep.subr.mxu0 0.0
    %172 = vmatpush1.msra.mxu0 0.0
    %173 = vmatprep.subr.mxu0 0.0
    %174 = vmatpush1.msra.mxu0 0.0
    %175 = vmatprep.subr.mxu0 0.0
    %176 = vmatpush1.msra.mxu0 0.0
    %177 = vmatprep.subr.mxu0 0.0
    %178 = vmatpush1.msra.mxu0 %v144
    %179 = vmatprep.subr.mxu0 0.0
    %180 = vmatpush1.msra.mxu0 %v143
    %181 = vmatprep.subr.mxu0 0.0
    %182 = vmatpush1.msra.mxu0 %v142
    %183 = vmatprep.subr.mxu0 0.0
    %184 = vmatpush1.msra.mxu0 %v141
    %185 = vmatprep.subr.mxu0 0.0
    %186 = vmatpush2.msra.mxu0 0.0
    %187 = vmatprep.subr.mxu0 0.0
    %188 = vmatpush2.msra.mxu0 0.0
    %189 = vmatprep.subr.mxu0 0.0
    %190 = vmatpush2.msra.mxu0 0.0
    %191 = vmatprep.subr.mxu0 0.0
    %192 = vmatpush2.msra.mxu0 0.0
    %193 = vmatprep.subr.mxu0 0.0
    %194 = vmatpush2.msra.mxu0 0.0
    %195 = vmatprep.subr.mxu0 0.0
    %196 = vmatpush2.msra.mxu0 0.0
    %197 = vmatprep.subr.mxu0 0.0
    %198 = vmatpush2.msra.mxu0 0.0
    %199 = vmatprep.subr.mxu0 0.0
    %200 = vmatpush2.msra.mxu0 0.0
    %201 = vmatprep.subr.mxu0 0.0
    %202 = vmatpush2.msra.mxu0 0.0
    %203 = vmatprep.subr.mxu0 0.0
    %204 = vmatpush2.msra.mxu0 0.0
    %205 = vmatprep.subr.mxu0 0.0
    %206 = vmatpush2.msra.mxu0 0.0
    %207 = vmatprep.subr.mxu0 0.0
    %208 = vmatpush2.msra.mxu0 0.0
    %209 = vmatprep.subr.mxu0 0.0
    %210 = vmatpush2.msra.mxu0 0.0
    %211 = vmatprep.subr.mxu0 0.0
    %212 = vmatpush2.msra.mxu0 0.0
    %213 = vmatprep.subr.mxu0 0.0
    %214 = vmatpush2.msra.mxu0 0.0
    %215 = vmatprep.subr.mxu0 0.0
    %216 = vmatpush2.msra.mxu0 0.0
    %217 = vmatprep.mubr.f32.mxu0 0.0
    %218 = vmatmul.mubr.f32.gmra.mxu0 %v151
    %v219 = vpop.f32.mrf.mxu0
    %v220 = vadd.f32 %v149, %v219
    %v221 = vpop.f32.mrf.mxu0
    %222 = vdwg.mxu0
    %vm223 = vcmask 254976
    %224 = vst.msk [vmem:[#allocation8] sm:$0x3] %vm223, %v220
    // Predicated region
    $region30: #{tpu_custom_call.1} parent=1 // pred_check
      _
    $region31: #{tpu_custom_call.1} parent=1 // pred_check_branch
      %226 = sbr.rel (0) target = $region33
    $region32: #{tpu_custom_call.1} parent=1 // pred_region
      %s228 = ssub.s32 32, 32
      %229 = vsyncadd [#allocation4], %s228
      %s231 = sshll.u32 [#allocation8], 4
      %s232 = int_to_ptr.vmem [resolvable:$true] %s231
      %234 = dma.vmem_to_hbm [thread:$0]  %s232, 32, %s4, [#allocation4]
    $region33: #{tpu_custom_call.1} parent=1 // pred_fallthru
      _
    // Predicated region
    $region34: #{tpu_custom_call.1} parent=1 // pred_check
      _
    $region35: #{tpu_custom_call.1} parent=1 // pred_check_branch
      %236 = sbr.rel (0) target = $region37
    $region36: #{tpu_custom_call.1} parent=1 // pred_region
      %237 = dma.done [#allocation4], 32
    $region37: #{tpu_custom_call.1} parent=1 // pred_fallthru
      _
    %238 = vsyncpa [#allocation3], 1
    %239 = vsyncpa [#allocation6], 1
    %240 = vsyncpa [#allocation4], 1

</llo_original>
